<compile_context>
chip_gen: v7x
topology: tpu7x:2x2x1
jax: 0.10.0
libtpu: 0.0.40
codegen_flags: <defaults>
</compile_context>

<pallas_src>
import functools
import math

import jax
import jax.numpy as jnp
from jax.experimental import pallas as pl
from jax.experimental.pallas import tpu as pltpu


_EPS = 1e-7


def _round_up(v, m):
    return ((v + m - 1) // m) * m


def _sublane_pack(itemsize):
    # Sub-32-bit dtypes pack along sublanes: f32 -> 8, bf16 -> 16, int8/fp8 -> 32.
    return 8 * max(1, 4 // itemsize)


def _vmem_budget():
    """Returns (per-buffer target bytes, scoped vmem limit bytes) for this chip."""
    try:
        vmem_bytes = pltpu.get_tpu_info().vmem_capacity_bytes
    except Exception:
        vmem_bytes = 64 * 1024 * 1024  # conservative (v7x-sized) fallback
    # ~3/4 of physical VMEM, capped at 96 MiB (v5e/v6e: 96 MiB, v7x: 48 MiB).
    vmem_limit = min((vmem_bytes * 3) // 4, 96 * 1024 * 1024)
    # Streaming kernel: input + output, each double-buffered -> 4 live buffers.
    # Budget each buffer at limit/8 so ~half the scoped limit is in flight.
    target_bytes = max(256 * 1024, vmem_limit // 8)
    return target_bytes, vmem_limit


def _lp_norm(x, axis, power):
    if power == 2.0:
        return jnp.sqrt(jnp.sum(x * x, axis=axis, keepdims=True))
    # TODO(synk): matches the module's literal formula; x**power NaNs on negative
    # inputs for non-even float powers (unlike F.normalize's |x|**p).
    return jnp.sum(x ** power, axis=axis, keepdims=True) ** (1.0 / power)


def _safe_recip(d):
    # Approx EUP reciprocal (separate VLIW slot) + one Newton step -> ~f32 accuracy.
    r = pl.reciprocal(d, approx=True)
    return r * (2.0 - d * r)


def _normalize_chw_kernel(x_ref, o_ref, *, power):
    # x_ref / o_ref: (tile_n, C, tile_hw); reduce over channels (axis 1, sublanes).
    x = x_ref[...].astype(jnp.float32)
    norm = _lp_norm(x, 1, power)
    o_ref[...] = (x * _safe_recip(norm + _EPS)).astype(o_ref.dtype)


def _normalize_rows_kernel(x_ref, o_ref, *, power):
    # x_ref / o_ref: (block_rows, C); reduce over channels (last axis, lanes).
    x = x_ref[...].astype(jnp.float32)
    norm = _lp_norm(x, -1, power)
    o_ref[...] = (x * _safe_recip(norm + _EPS)).astype(o_ref.dtype)


def _normalize_spatial(x, power):
    """x: (N, C, *spatial), normalized over C; operates on the native layout."""
    n, c = x.shape[0], x.shape[1]
    hw = math.prod(x.shape[2:])
    itemsize = x.dtype.itemsize
    target_bytes, vmem_limit = _vmem_budget()

    x3 = x.reshape(n, c, hw)  # free: merges trailing spatial dims only

    # VMEM footprint accounting uses the padded layout, not nominal C * itemsize.
    c_pad = _round_up(c, _sublane_pack(itemsize))
    hw_pad = _round_up(hw, 128)
    bytes_per_lane = c_pad * itemsize
    per_batch_bytes = bytes_per_lane * hw_pad

    if per_batch_bytes <= target_bytes and (n > 1 or per_batch_bytes <= (1 << 20)):
        # Small spatial extent: one block holds the whole (C, H*W) plane (last two
        # block dims == full array dims, so no (8,128) constraint issues) and we
        # tile over N to keep each DMA near target_bytes. Ragged last N block OK.
        tile_n = max(1, min(n, target_bytes // per_batch_bytes))
        if n > 1 and n // tile_n < 2 and n * per_batch_bytes > (2 << 20):
            tile_n = (n + 1) // 2  # keep >=2 grid steps so both v7x TCs get work
        grid = (pl.cdiv(n, tile_n),)
        block = (tile_n, c, hw)
        in_spec = pl.BlockSpec(block, lambda i: (i, 0, 0))
        out_spec = pl.BlockSpec(block, lambda i: (i, 0, 0))
        semantics = ("parallel",)
    else:
        # Large spatial extent: lane-tile H*W in 128-multiples with a cdiv grid.
        # The last block may be ragged: the reduction is over C only (per-lane
        # independent) and OOB lanes are write-masked, so no pad/slice pass.
        max_lanes = max(128, (target_bytes // bytes_per_lane) // 128 * 128)
        tile_hw = min(max_lanes, hw_pad)
        if n == 1 and hw_pad >= 256:
            # Guarantee >=2 grid steps so v7x's second TensorCore isn't idle.
            tile_hw = min(tile_hw, _round_up(pl.cdiv(hw, 2), 128))
        grid = (n, pl.cdiv(hw, tile_hw))
        block = (1, c, tile_hw)
        in_spec = pl.BlockSpec(block, lambda i, t: (i, 0, t))
        out_spec = pl.BlockSpec(block, lambda i, t: (i, 0, t))
        semantics = ("parallel", "parallel")

    out3 = pl.pallas_call(
        functools.partial(_normalize_chw_kernel, power=power),
        out_shape=jax.ShapeDtypeStruct((n, c, hw), x.dtype),
        grid_spec=pltpu.PrefetchScalarGridSpec(
            num_scalar_prefetch=0,
            grid=grid,
            in_specs=[in_spec],
            out_specs=out_spec,
        ),
        compiler_params=pltpu.CompilerParams(
            dimension_semantics=semantics,
            vmem_limit_bytes=vmem_limit,
        ),
        cost_estimate=pl.CostEstimate(
            flops=3 * n * c * hw,
            transcendentals=2 * n * hw,
            bytes_accessed=2 * n * c * hw * itemsize,
        ),
    )(x3)
    return out3.reshape(x.shape)


def _normalize_rows(x, power):
    """x: (rows, C), normalized over the last axis (channels already on lanes)."""
    rows, c = x.shape
    itemsize = x.dtype.itemsize
    target_bytes, vmem_limit = _vmem_budget()

    bytes_per_row = _round_up(c, 128) * itemsize  # lane-padded channel count
    max_rows = max(8, (target_bytes // bytes_per_row) // 8 * 8)
    block_rows = min(rows, max_rows)
    if rows >= 16 and pl.cdiv(rows, block_rows) < 2 and rows * bytes_per_row > (2 << 20):
        block_rows = _round_up(pl.cdiv(rows, 2), 8)  # >=2 steps for v7x's 2 TCs
    grid = (pl.cdiv(rows, block_rows),)  # ragged last block is fine (no pad copy)

    return pl.pallas_call(
        functools.partial(_normalize_rows_kernel, power=power),
        out_shape=jax.ShapeDtypeStruct((rows, c), x.dtype),
        grid_spec=pltpu.PrefetchScalarGridSpec(
            num_scalar_prefetch=0,
            grid=grid,
            in_specs=[pl.BlockSpec((block_rows, c), lambda i: (i, 0))],
            out_specs=pl.BlockSpec((block_rows, c), lambda i: (i, 0)),
        ),
        compiler_params=pltpu.CompilerParams(
            dimension_semantics=("parallel",),
            vmem_limit_bytes=vmem_limit,
        ),
        cost_estimate=pl.CostEstimate(
            flops=3 * rows * c,
            transcendentals=2 * rows,
            bytes_accessed=2 * rows * c * itemsize,
        ),
    )(x)


def normalize(x: jax.Array, power: float = 2.0) -> jax.Array:
    """PyTorch `Normalize`: Lp-normalize over axis 1 (channels)."""
    power = float(power)
    if x.ndim == 2:
        return _normalize_rows(x, power)
    if x.ndim >= 3:
        return _normalize_spatial(x, power)
    raise ValueError(f"unsupported rank {x.ndim}")


if __name__ == "__main__":
    key = jax.random.PRNGKey(0)
    x = jax.random.normal(key, (2, 4, 16, 16), dtype=jnp.float32)  # NCHW

    out = jax.block_until_ready(normalize(x, power=2.0))

    # Reference: plain-JAX PyTorch-equivalent formula.
    norm_ref = jnp.sum(x ** 2, axis=1, keepdims=True) ** 0.5
    ref = x / (norm_ref + 1e-7)
    assert out.shape == x.shape and out.dtype == x.dtype
    assert float(jnp.max(jnp.abs(out - ref))) < 1e-4

    # Also exercise the 2-D (rows, C) path.
    x2 = jax.random.normal(jax.random.PRNGKey(1), (8, 256), dtype=jnp.float32)
    out2 = jax.block_until_ready(normalize(x2, power=2.0))
    norm2 = jnp.sum(x2 ** 2, axis=1, keepdims=True) ** 0.5
    ref2 = x2 / (norm2 + 1e-7)
    assert float(jnp.max(jnp.abs(out2 - ref2))) < 1e-4

    # Exercise the large-spatial path with a non-128-multiple H*W (ragged blocks,
    # no padding copy) on a modest shape.
    x3 = jax.random.normal(jax.random.PRNGKey(2), (1, 4, 24, 30), dtype=jnp.float32)
    out3 = jax.block_until_ready(normalize(x3, power=2.0))
    norm3 = jnp.sum(x3 ** 2, axis=1, keepdims=True) ** 0.5
    ref3 = x3 / (norm3 + 1e-7)
    assert float(jnp.max(jnp.abs(out3 - ref3))) < 1e-4

    print("KERNEL_OK")
</pallas_src>

<mosaic_0001>
module attributes {stable_mosaic.version = 11 : i64} {
  func.func @_normalize_chw_kernel(%arg0: i32, %arg1: memref<2x4x256xf32, #tpu.memory_space<vmem>>, %arg2: memref<2x4x256xf32, #tpu.memory_space<vmem>>) attributes {dimension_semantics = [#tpu.dimension_semantics<parallel>], iteration_bounds = array<i64: 1>, scalar_prefetch = 0 : i64, scratch_operands = 0 : i64, tpu.core_type = #tpu.core_type<tc>, window_params = [{transform_indices = @transform_0, window_bounds = array<i64: 2, 4, 256>}, {transform_indices = @transform_1, window_bounds = array<i64: 2, 4, 256>}]} {
    %c0 = arith.constant 0 : index
    %c0_0 = arith.constant 0 : index
    %c0_1 = arith.constant 0 : index
    %0 = vector.load %arg1[%c0, %c0_0, %c0_1] : memref<2x4x256xf32, #tpu.memory_space<vmem>>, vector<2x4x256xf32>
    %1 = arith.mulf %0, %0 : vector<2x4x256xf32>
    %cst = arith.constant dense<0.000000e+00> : vector<2x256xf32>
    %2 = vector.multi_reduction <add>, %1, %cst [1] : vector<2x4x256xf32> to vector<2x256xf32>
    %3 = vector.shape_cast %2 : vector<2x256xf32> to vector<2x1x256xf32>
    %4 = math.sqrt %3 : vector<2x1x256xf32>
    %cst_2 = arith.constant 1.000000e-07 : f32
    %5 = vector.broadcast %cst_2 : f32 to vector<2x1x256xf32>
    %6 = arith.addf %4, %5 : vector<2x1x256xf32>
    %7 = tpu.reciprocal %6 {approx = true} : vector<2x1x256xf32> -> vector<2x1x256xf32>
    %8 = arith.mulf %6, %7 : vector<2x1x256xf32>
    %cst_3 = arith.constant 2.000000e+00 : f32
    %9 = vector.broadcast %cst_3 : f32 to vector<2x1x256xf32>
    %10 = arith.subf %9, %8 : vector<2x1x256xf32>
    %11 = arith.mulf %7, %10 : vector<2x1x256xf32>
    %12 = vector.broadcast %11 : vector<2x1x256xf32> to vector<2x4x256xf32>
    %13 = arith.mulf %0, %12 : vector<2x4x256xf32>
    %c0_4 = arith.constant 0 : index
    %c0_5 = arith.constant 0 : index
    %c0_6 = arith.constant 0 : index
    %14 = vector.load %arg2[%c0_4, %c0_5, %c0_6] : memref<2x4x256xf32, #tpu.memory_space<vmem>>, vector<2x4x256xf32>
    tpu.vector_store %arg2[%c0_4, %c0_5, %c0_6], %13 {strides = array<i32>} : memref<2x4x256xf32, #tpu.memory_space<vmem>>, vector<2x4x256xf32>,
    return
  }
  func.func @transform_0(%arg0: i32) -> (i32, i32, i32) {
    %c0_i32 = arith.constant 0 : i32
    %c0_i32_0 = arith.constant 0 : i32
    %c0_i32_1 = arith.constant 0 : i32
    return %arg0, %c0_i32, %c0_i32_0 : i32, i32, i32
  }
  func.func @transform_1(%arg0: i32) -> (i32, i32, i32) {
    %c0_i32 = arith.constant 0 : i32
    %c0_i32_0 = arith.constant 0 : i32
    %c0_i32_1 = arith.constant 0 : i32
    return %arg0, %c0_i32, %c0_i32_0 : i32, i32, i32
  }
}

</mosaic_0001>

<llo_original>
// kernel: tpu_custom_call.1
$region0: #{tpu_custom_call.1}
  #allocation0 [shape = 'u32[]', space=smem, size = 0x4, offset = 0x4, fixed_abs, tag = 'smem constant byte address 0x4 - core index']
  #allocation1 [shape = 'u32[144,128]{1,0:T(1,128)}', space=vmem, size = 0x12000, scoped, tag = 'internal scratch']
  %s0 = inlined_call_operand.hbm [shape: f32[2,4,256], index: 0, kind: input, shape index: {}]
  %s1 = inlined_call_operand.hbm [shape: f32[2,4,256], index: 1, kind: output, shape index: {}]
  %s2 = sld [smem:[#allocation0]]
  $region18: #{tpu_custom_call.1} parent=0
    _
  %s4 = ssub.s32 1, %s2
  %s5 = scalar_select 0, %s4, %s2
  $region1: #{tpu_custom_call.1} parent=0
    #allocation2 [shape = 'u8[8192]{0}', space=vmem, size = 0x2000, scoped, tag = 'input window, operand 0, single buffered']
    #allocation3 [shape = 's32[1]{0}', space=sflag, size = 0x4, scoped, tag = 'scoped memory for tpu_custom_call.1']
    #allocation4 [shape = 's32[1]{0}', space=sflag, size = 0x4, scoped, tag = 'scoped memory for tpu_custom_call.1']
    #allocation5 [shape = 'u8[8192]{0}', space=vmem, size = 0x2000, scoped, tag = 'output window, operand 0, single buffered']
    %6 = vsyncpa [#allocation3], 0
    %7 = vsyncpa [#allocation4], 0
    // Predicated region
    $region2: #{tpu_custom_call.1} parent=1 // pred_check
      _
    $region3: #{tpu_custom_call.1} parent=1 // pred_check_branch
      %9 = sbr.rel (0) target = $region5
    $region4: #{tpu_custom_call.1} parent=1 // pred_region
      %s11 = ssub.s32 256, 256
      %12 = vsyncadd [#allocation3], %s11
      %s13 = sshll.u32 [#allocation2], 4
      %s14 = int_to_ptr.vmem [resolvable:$true] %s13
      %19 = dma.hbm_to_vmem [thread:$0]  %s0, 256, %s14, [#allocation3], 128, 128, 8
    $region5: #{tpu_custom_call.1} parent=1 // pred_fallthru
      _
    // Predicated region
    $region6: #{tpu_custom_call.1} parent=1 // pred_check
      _
    $region7: #{tpu_custom_call.1} parent=1 // pred_check_branch
      %21 = sbr.rel (0) target = $region9
    $region8: #{tpu_custom_call.1} parent=1 // pred_region
      %22 = dma.done [#allocation3], 256
    $region9: #{tpu_custom_call.1} parent=1 // pred_fallthru
      _
    %v23 = vld [vmem:[#allocation2] sm:$0xff]
    %v24 = vld [vmem:[#allocation2 + $0x8] sm:$0xff]
    %v25 = vmul.f32 %v23, %v23
    %v26 = vmul.f32 %v24, %v24
    %v29 = vcombine.high %v25, %v25
    %v30 = vcombine.high %v26, %v26
    %vm33 = vcmask 1043456
    %v34 = vsel %vm33, %v25, 0.0
    %v35 = vrot.slane %v34, 4
    %v36 = vadd.f32 %v34, %v35
    %v37 = vrot.slane %v36, 2
    %v38 = vadd.f32 %v36, %v37
    %v39 = vrot.slane %v38, 1
    %v40 = vadd.f32 %v38, %v39
    %v41 = vsel %vm33, %v29, 0.0
    %v42 = vrot.slane %v41, 4
    %v43 = vadd.f32 %v41, %v42
    %v44 = vrot.slane %v43, 2
    %v45 = vadd.f32 %v43, %v44
    %v46 = vrot.slane %v45, 1
    %v47 = vadd.f32 %v45, %v46
    %v48 = vsel %vm33, %v26, 0.0
    %v49 = vrot.slane %v48, 4
    %v50 = vadd.f32 %v48, %v49
    %v51 = vrot.slane %v50, 2
    %v52 = vadd.f32 %v50, %v51
    %v53 = vrot.slane %v52, 1
    %v54 = vadd.f32 %v52, %v53
    %v55 = vsel %vm33, %v30, 0.0
    %v56 = vrot.slane %v55, 4
    %v57 = vadd.f32 %v55, %v56
    %v58 = vrot.slane %v57, 2
    %v59 = vadd.f32 %v57, %v58
    %v60 = vrot.slane %v59, 1
    %v61 = vadd.f32 %v59, %v60
    %v62 = vrsqrt.pop %v40
    %v63 = vmul.f32 %v40, %v62
    %vm64 = vcmp.eq.f32.partialorder %v40, inf
    %v65 = vsel %vm64, %v40, %v63
    %vm66 = vcmp.eq.f32.partialorder %v40, 0.0
    %v67 = vand.u32 %v40, 2147483648
    %v68 = vsel %vm66, %v67, %v65
    %v69 = vrsqrt.pop %v47
    %v70 = vmul.f32 %v47, %v69
    %vm71 = vcmp.eq.f32.partialorder %v47, inf
    %v72 = vsel %vm71, %v47, %v70
    %vm73 = vcmp.eq.f32.partialorder %v47, 0.0
    %v74 = vand.u32 %v47, 2147483648
    %v75 = vsel %vm73, %v74, %v72
    %v76 = vrsqrt.pop %v54
    %v77 = vmul.f32 %v54, %v76
    %vm78 = vcmp.eq.f32.partialorder %v54, inf
    %v79 = vsel %vm78, %v54, %v77
    %vm80 = vcmp.eq.f32.partialorder %v54, 0.0
    %v81 = vand.u32 %v54, 2147483648
    %v82 = vsel %vm80, %v81, %v79
    %v83 = vrsqrt.pop %v61
    %v84 = vmul.f32 %v61, %v83
    %vm85 = vcmp.eq.f32.partialorder %v61, inf
    %v86 = vsel %vm85, %v61, %v84
    %vm87 = vcmp.eq.f32.partialorder %v61, 0.0
    %v88 = vand.u32 %v61, 2147483648
    %v89 = vsel %vm87, %v88, %v86
    %v90 = vadd.f32 %v68, 1e-07
    %v91 = vadd.f32 %v75, 1e-07
    %v92 = vadd.f32 %v82, 1e-07
    %v93 = vadd.f32 %v89, 1e-07
    %v94 = vrcp.pop %v90
    %v95 = vrcp.pop %v91
    %v96 = vrcp.pop %v92
    %v97 = vrcp.pop %v93
    %v98 = vmul.f32 %v90, %v94
    %v99 = vmul.f32 %v91, %v95
    %v100 = vmul.f32 %v92, %v96
    %v101 = vmul.f32 %v93, %v97
    %v102 = vsub.f32 2.0, %v98
    %v103 = vsub.f32 2.0, %v99
    %v104 = vsub.f32 2.0, %v100
    %v105 = vsub.f32 2.0, %v101
    %v106 = vmul.f32 %v94, %v102
    %v107 = vmul.f32 %v95, %v103
    %v108 = vmul.f32 %v96, %v104
    %v109 = vmul.f32 %v97, %v105
    %v114 = vcombine.low %v106, %v107
    %v115 = vcombine.low %v108, %v109
    %v118 = vmul.f32 %v23, %v114
    %v119 = vmul.f32 %v24, %v115
    %120 = vst [vmem:[#allocation5] sm:$0xff] %v118
    %121 = vst [vmem:[#allocation5 + $0x8] sm:$0xff] %v119
    // Predicated region
    $region10: #{tpu_custom_call.1} parent=1 // pred_check
      _
    $region11: #{tpu_custom_call.1} parent=1 // pred_check_branch
      %123 = sbr.rel (0) target = $region13
    $region12: #{tpu_custom_call.1} parent=1 // pred_region
      %s125 = ssub.s32 256, 256
      %126 = vsyncadd [#allocation4], %s125
      %s127 = sshll.u32 [#allocation5], 4
      %s128 = int_to_ptr.vmem [resolvable:$true] %s127
      %133 = dma.vmem_to_hbm [thread:$0]  %s128, 256, %s1, [#allocation4], 128, 128, 8
    $region13: #{tpu_custom_call.1} parent=1 // pred_fallthru
      _
    // Predicated region
    $region14: #{tpu_custom_call.1} parent=1 // pred_check
      _
    $region15: #{tpu_custom_call.1} parent=1 // pred_check_branch
      %135 = sbr.rel (0) target = $region17
    $region16: #{tpu_custom_call.1} parent=1 // pred_region
      %136 = dma.done [#allocation4], 256
    $region17: #{tpu_custom_call.1} parent=1 // pred_fallthru
      _
    %137 = vsyncpa [#allocation3], 1
    %138 = vsyncpa [#allocation4], 1

</llo_original>
